<compile_context>
chip_gen: v7x
topology: tpu7x:2x2x1
jax: 0.10.0
libtpu: 0.0.40
codegen_flags: <defaults>
</compile_context>

<pallas_src>
import functools
import math

import jax
import jax.numpy as jnp
from jax import lax
from jax.experimental import pallas as pl
from jax.experimental.pallas import tpu as pltpu

_MiB = 1 << 20


def _foreach(n, body, *, unroll_limit=64):
    """Run body(i) for i in [0, n). Fully unrolled when small so the scheduler can
    co-issue scalar address math with loads / DMA-descriptor pushes."""
    if n <= unroll_limit:
        for i in range(n):
            body(i)
    else:
        def wrapped(i, carry):
            body(i)
            return carry
        lax.fori_loop(0, n, wrapped, 0)


# ---------------------------------------------------------------------------
# Fast path: table + PE resident in VMEM, gather by dynamic in-VMEM indexing.
# ---------------------------------------------------------------------------
def _embed_kernel_vmem(ids_ref, pe_ref, table_ref, out_ref, gather_buf, *,
                       rows, seq_len, vocab_size, scale):
    i = pl.program_id(0)
    base = i * rows
    # Starting sequence position of this tile (tiles never straddle a batch row
    # because seq_len % rows == 0).
    seq0 = pl.multiple_of(base % seq_len, rows)

    def gather_row(r):
        tok = ids_ref[base + r]
        # nn.Embedding would raise on out-of-range ids; clamp instead of OOB access.
        tok = jnp.clip(tok, 0, vocab_size - 1)
        gather_buf[pl.ds(r, 1), :] = table_ref[pl.ds(tok, 1), :]

    _foreach(rows, gather_row)

    # Keep arithmetic in f32 (v5e VPU has no bf16 ALU); cast only at the store.
    e = gather_buf[...].astype(jnp.float32) * jnp.float32(scale)
    e = e + pe_ref[pl.ds(seq0, rows), :].astype(jnp.float32)
    out_ref[...] = e.astype(out_ref.dtype)


# ---------------------------------------------------------------------------
# HBM-gather path: per-row DMA gather, double-buffered, prefetch next tile.
# ---------------------------------------------------------------------------
def _embed_kernel_hbm(ids_ref, pe_ref, table_hbm, out_ref, gather_buf, sems, *,
                      rows, seq_len, vocab_size, scale):
    s = pl.program_id(0)            # sequence-tile index ("parallel", megacore-sharded)
    b = pl.program_id(1)            # batch index ("arbitrary": carries the DMA pipeline)
    nb = pl.num_programs(1)
    slot = b % 2

    def issue_gather(batch, slot_):
        base = batch * seq_len + s * rows

        def start_row(r):
            tok = ids_ref[base + r]
            tok = jnp.clip(tok, 0, vocab_size - 1)
            pltpu.make_async_copy(
                table_hbm.at[pl.ds(tok, 1), :],
                gather_buf.at[slot_, pl.ds(r, 1), :],
                sems.at[slot_],                    # one shared sem per buffer slot
            ).start()

        _foreach(rows, start_row)

    @pl.when(b == 0)
    def _():                        # first step of this inner sweep: prime slot 0
        issue_gather(0, 0)

    @pl.when(b + 1 < nb)
    def _():                        # prefetch the next batch tile while computing this one
        issue_gather(b + 1, 1 - slot)

    # Aggregate wait: all `rows` row copies of this slot signal the same DMA semaphore
    # (bytes-counted), so waiting on the full (rows, D) slot waits for their sum.  The src
    # slice here is only used for its extent.
    pltpu.make_async_copy(
        table_hbm.at[pl.ds(0, rows), :],
        gather_buf.at[slot],
        sems.at[slot],
    ).wait()

    e = gather_buf[slot].astype(jnp.float32) * jnp.float32(scale)
    e = e + pe_ref[...].astype(jnp.float32)
    out_ref[...] = e.astype(out_ref.dtype)


# ---------------------------------------------------------------------------
# Wrapper
# ---------------------------------------------------------------------------
def _vmem_budget_bytes():
    # Per-core budget that is safe on every generation (v7x: 64 MiB physical / core).
    try:
        cap = int(pltpu.get_tpu_info().vmem_capacity_bytes)
        return int(min(max(cap // 2, 32 * _MiB), 96 * _MiB))
    except Exception:
        return 40 * _MiB


def _pick_rows(seq_len, per_row_bytes, budget_bytes, max_rows):
    """Largest multiple-of-8 divisor of seq_len whose working set fits the budget."""
    best = None
    r = 8
    limit = min(seq_len, max_rows)
    while r <= limit:
        if seq_len % r == 0 and r * per_row_bytes <= budget_bytes:
            best = r
        r += 8
    return best


def embedding_layer(ids, table, pe, *, out_dtype=None, force_hbm_gather=False):
    """ids: (B, S) int, table: (V, D), pe: (S, D)  ->  (B, S, D)."""
    B, S = ids.shape
    V, D = table.shape
    assert pe.shape == (S, D), pe.shape
    assert D % 128 == 0, "d_model must be a multiple of 128 (lane-dense tiles)"
    assert S % 8 == 0, "sequence length must be a multiple of 8 (sublane tiling)"

    out_dtype = jnp.dtype(out_dtype or table.dtype)
    n_tokens = B * S
    scale = math.sqrt(D)
    budget = _vmem_budget_bytes()

    ids_flat = ids.reshape(n_tokens).astype(jnp.int32)
    pe = pe.astype(jnp.float32)

    elt = jnp.dtype(table.dtype).itemsize
    out_elt = out_dtype.itemsize

    # Conservatively assume 2 pipeline buffers even for constant-index (resident) inputs.
    resident = 2 * (V * D * elt + S * D * 4)              # table + PE
    fast_per_row = D * (2 * out_elt + elt)                # out (double-buffered) + gather scratch
    use_fast = (not force_hbm_gather) and (resident + 8 * fast_per_row <= budget)

    if use_fast:
        rows = _pick_rows(S, fast_per_row, budget - resident,
                          max_rows=max(8, n_tokens // 2))   # keep >=2 grid steps (megacore)
        assert rows is not None, "could not find a tile size fitting VMEM"
        grid = (n_tokens // rows,)
        kernel = functools.partial(
            _embed_kernel_vmem, rows=rows, seq_len=S, vocab_size=V, scale=scale)
        grid_spec = pltpu.PrefetchScalarGridSpec(
            num_scalar_prefetch=1,                           # token ids -> SMEM
            grid=grid,
            in_specs=[
                # Constant index_map => fetched from HBM once per core, never re-DMAed.
                pl.BlockSpec((S, D), lambda i, ids: (0, 0)),   # PE (resident)
                pl.BlockSpec((V, D), lambda i, ids: (0, 0)),   # table (resident)
            ],
            out_specs=pl.BlockSpec((rows, D), lambda i, ids: (i, 0)),
            scratch_shapes=[pltpu.VMEM((rows, D), table.dtype)],
        )
        dim_sem = ("parallel",)
        needed = resident + rows * fast_per_row
    else:
        # PE + out double-buffered blocks + 2-slot gather buffer.
        hbm_per_row = D * (2 * 4 + 2 * out_elt + 2 * elt)
        rows = _pick_rows(S, hbm_per_row, budget, max_rows=512)
        assert rows is not None, "could not find a tile size fitting VMEM"
        n_s = S // rows
        grid = (n_s, B)
        kernel = functools.partial(
            _embed_kernel_hbm, rows=rows, seq_len=S, vocab_size=V, scale=scale)
        grid_spec = pltpu.PrefetchScalarGridSpec(
            num_scalar_prefetch=1,
            grid=grid,
            in_specs=[
                # PE block depends only on the sequence-tile index -> fetched once per
                # sequence tile, not once per (tile, batch) step.
                pl.BlockSpec((rows, D), lambda s, b, ids: (s, 0)),
                # Embedding table stays in HBM; rows are DMA-gathered in-kernel.
                pl.BlockSpec(memory_space=pl.ANY),
            ],
            out_specs=pl.BlockSpec((rows, D), lambda s, b, ids: (b * n_s + s, 0)),
            scratch_shapes=[
                pltpu.VMEM((2, rows, D), table.dtype),       # double-buffered gather
                pltpu.SemaphoreType.DMA((2,)),               # one shared DMA sem per slot
            ],
        )
        dim_sem = ("parallel", "arbitrary")
        needed = rows * hbm_per_row

    out_flat = pl.pallas_call(
        kernel,
        out_shape=jax.ShapeDtypeStruct((n_tokens, D), out_dtype),
        grid_spec=grid_spec,
        compiler_params=pltpu.CompilerParams(
            dimension_semantics=dim_sem,
            vmem_limit_bytes=int(min(budget, max(16 * _MiB, needed + 4 * _MiB))),
        ),
    )(ids_flat, pe, table)

    return out_flat.reshape(B, S, D)


def make_positional_encoding(max_len, d_model):
    """Matches PositionalEncoding.__init__ buffer construction."""
    position = jnp.arange(max_len, dtype=jnp.float32)[:, None]
    div_term = jnp.exp(
        jnp.arange(0, d_model, 2, dtype=jnp.float32) * -(math.log(10000.0) / d_model))
    pe = jnp.zeros((max_len, d_model), dtype=jnp.float32)
    pe = pe.at[:, 0::2].set(jnp.sin(position * div_term))
    pe = pe.at[:, 1::2].set(jnp.cos(position * div_term))
    return pe


if __name__ == "__main__":
    # Case 1: shapes implied by the module at small scale.
    B, S, D, V = 2, 8, 128, 64
    key = jax.random.PRNGKey(0)
    k_table, k_ids = jax.random.split(key)

    embed_table = jax.random.normal(k_table, (V, D), dtype=jnp.float32)  # nn.Embedding ~ N(0,1)
    token_ids = jax.random.randint(k_ids, (B, S), 0, V, dtype=jnp.int32)
    pe = make_positional_encoding(max_len=5000, d_model=D)[:S]           # pe[:, :x.size(1)]

    out = jax.block_until_ready(embedding_layer(token_ids, embed_table, pe))
    ref = embed_table[token_ids] * math.sqrt(D) + pe[None, :, :]
    assert out.shape == (B, S, D)
    assert jnp.allclose(out, ref, atol=1e-5, rtol=1e-5)

    # Case 2: a slightly larger configuration (still the VMEM-resident fast path).
    B2, S2, D2, V2 = 2, 64, 256, 1000
    k_t2, k_i2 = jax.random.split(jax.random.PRNGKey(0), 2)
    table2 = jax.random.normal(k_t2, (V2, D2), dtype=jnp.float32)
    ids2 = jax.random.randint(k_i2, (B2, S2), 0, V2, dtype=jnp.int32)
    pe2 = make_positional_encoding(max_len=5000, d_model=D2)[:S2]
    out2 = jax.block_until_ready(embedding_layer(ids2, table2, pe2))
    ref2 = table2[ids2] * math.sqrt(D2) + pe2[None, :, :]
    assert jnp.allclose(out2, ref2, atol=1e-5, rtol=1e-5)

    print("KERNEL_OK")
</pallas_src>

<mosaic_0001>
module attributes {stable_mosaic.version = 11 : i64} {
  func.func @_embed_kernel_vmem(%arg0: i32, %arg1: memref<16xi32, #tpu.memory_space<smem>>, %arg2: memref<8x128xf32, #tpu.memory_space<vmem>>, %arg3: memref<64x128xf32, #tpu.memory_space<vmem>>, %arg4: memref<8x128xf32, #tpu.memory_space<vmem>>, %arg5: memref<8x128xf32, #tpu.memory_space<vmem>>) attributes {dimension_semantics = [#tpu.dimension_semantics<parallel>], iteration_bounds = array<i64: 2>, scalar_prefetch = 1 : i64, scratch_operands = 1 : i64, tpu.core_type = #tpu.core_type<tc>, window_params = [{pipeline_mode = #tpu.pipeline_mode<synchronous>, transform_indices = @transform_0, window_bounds = array<i64: 8, 128>}, {pipeline_mode = #tpu.pipeline_mode<synchronous>, transform_indices = @transform_1, window_bounds = array<i64: 64, 128>}, {transform_indices = @transform_2, window_bounds = array<i64: 8, 128>}]} {
    %c8_i32 = arith.constant 8 : i32
    %0 = arith.muli %arg0, %c8_i32 : i32
    %c8_i32_0 = arith.constant 8 : i32
    %c0_i32 = arith.constant 0 : i32
    %1 = arith.cmpi eq, %c8_i32_0, %c0_i32 : i32
    %c1_i32 = arith.constant 1 : i32
    %2 = arith.select %1, %c1_i32, %c8_i32_0 : i32
    %3 = arith.remsi %0, %2 : i32
    %c0_i32_1 = arith.constant 0 : i32
    %4 = arith.cmpi ne, %3, %c0_i32_1 : i32
    %c0_i32_2 = arith.constant 0 : i32
    %5 = arith.cmpi slt, %3, %c0_i32_2 : i32
    %c0_i32_3 = arith.constant 0 : i32
    %6 = arith.cmpi slt, %2, %c0_i32_3 : i32
    %7 = arith.xori %5, %6 : i1
    %8 = arith.andi %7, %4 : i1
    %9 = arith.addi %3, %2 : i32
    %10 = arith.select %8, %9, %3 : i32
    %11 = tpu.assume_multiple %10, 8 : i32
    %c0_i32_4 = arith.constant 0 : i32
    %12 = arith.addi %0, %c0_i32_4 : i32
    %13 = arith.index_cast %12 : i32 to index
    %14 = memref.load %arg1[%13] : memref<16xi32, #tpu.memory_space<smem>>
    %c0_i32_5 = arith.constant 0 : i32
    %c63_i32 = arith.constant 63 : i32
    %15 = arith.maxsi %c0_i32_5, %14 : i32
    %16 = arith.minsi %c63_i32, %15 : i32
    %17 = arith.index_cast %16 : i32 to index
    %c0 = arith.constant 0 : index
    %18 = vector.load %arg3[%17, %c0] : memref<64x128xf32, #tpu.memory_space<vmem>>, vector<1x128xf32>
    %c0_6 = arith.constant 0 : index
    %c0_7 = arith.constant 0 : index
    %19 = vector.load %arg5[%c0_6, %c0_7] : memref<8x128xf32, #tpu.memory_space<vmem>>, vector<1x128xf32>
    tpu.vector_store %arg5[%c0_6, %c0_7], %18 {strides = array<i32>} : memref<8x128xf32, #tpu.memory_space<vmem>>, vector<1x128xf32>,
    %c1_i32_8 = arith.constant 1 : i32
    %20 = arith.addi %0, %c1_i32_8 : i32
    %21 = arith.index_cast %20 : i32 to index
    %22 = memref.load %arg1[%21] : memref<16xi32, #tpu.memory_space<smem>>
    %c0_i32_9 = arith.constant 0 : i32
    %c63_i32_10 = arith.constant 63 : i32
    %23 = arith.maxsi %c0_i32_9, %22 : i32
    %24 = arith.minsi %c63_i32_10, %23 : i32
    %25 = arith.index_cast %24 : i32 to index
    %c0_11 = arith.constant 0 : index
    %26 = vector.load %arg3[%25, %c0_11] : memref<64x128xf32, #tpu.memory_space<vmem>>, vector<1x128xf32>
    %c1 = arith.constant 1 : index
    %c0_12 = arith.constant 0 : index
    %27 = vector.load %arg5[%c1, %c0_12] : memref<8x128xf32, #tpu.memory_space<vmem>>, vector<1x128xf32>
    tpu.vector_store %arg5[%c1, %c0_12], %26 {strides = array<i32>} : memref<8x128xf32, #tpu.memory_space<vmem>>, vector<1x128xf32>,
    %c2_i32 = arith.constant 2 : i32
    %28 = arith.addi %0, %c2_i32 : i32
    %29 = arith.index_cast %28 : i32 to index
    %30 = memref.load %arg1[%29] : memref<16xi32, #tpu.memory_space<smem>>
    %c0_i32_13 = arith.constant 0 : i32
    %c63_i32_14 = arith.constant 63 : i32
    %31 = arith.maxsi %c0_i32_13, %30 : i32
    %32 = arith.minsi %c63_i32_14, %31 : i32
    %33 = arith.index_cast %32 : i32 to index
    %c0_15 = arith.constant 0 : index
    %34 = vector.load %arg3[%33, %c0_15] : memref<64x128xf32, #tpu.memory_space<vmem>>, vector<1x128xf32>
    %c2 = arith.constant 2 : index
    %c0_16 = arith.constant 0 : index
    %35 = vector.load %arg5[%c2, %c0_16] : memref<8x128xf32, #tpu.memory_space<vmem>>, vector<1x128xf32>
    tpu.vector_store %arg5[%c2, %c0_16], %34 {strides = array<i32>} : memref<8x128xf32, #tpu.memory_space<vmem>>, vector<1x128xf32>,
    %c3_i32 = arith.constant 3 : i32
    %36 = arith.addi %0, %c3_i32 : i32
    %37 = arith.index_cast %36 : i32 to index
    %38 = memref.load %arg1[%37] : memref<16xi32, #tpu.memory_space<smem>>
    %c0_i32_17 = arith.constant 0 : i32
    %c63_i32_18 = arith.constant 63 : i32
    %39 = arith.maxsi %c0_i32_17, %38 : i32
    %40 = arith.minsi %c63_i32_18, %39 : i32
    %41 = arith.index_cast %40 : i32 to index
    %c0_19 = arith.constant 0 : index
    %42 = vector.load %arg3[%41, %c0_19] : memref<64x128xf32, #tpu.memory_space<vmem>>, vector<1x128xf32>
    %c3 = arith.constant 3 : index
    %c0_20 = arith.constant 0 : index
    %43 = vector.load %arg5[%c3, %c0_20] : memref<8x128xf32, #tpu.memory_space<vmem>>, vector<1x128xf32>
    tpu.vector_store %arg5[%c3, %c0_20], %42 {strides = array<i32>} : memref<8x128xf32, #tpu.memory_space<vmem>>, vector<1x128xf32>,
    %c4_i32 = arith.constant 4 : i32
    %44 = arith.addi %0, %c4_i32 : i32
    %45 = arith.index_cast %44 : i32 to index
    %46 = memref.load %arg1[%45] : memref<16xi32, #tpu.memory_space<smem>>
    %c0_i32_21 = arith.constant 0 : i32
    %c63_i32_22 = arith.constant 63 : i32
    %47 = arith.maxsi %c0_i32_21, %46 : i32
    %48 = arith.minsi %c63_i32_22, %47 : i32
    %49 = arith.index_cast %48 : i32 to index
    %c0_23 = arith.constant 0 : index
    %50 = vector.load %arg3[%49, %c0_23] : memref<64x128xf32, #tpu.memory_space<vmem>>, vector<1x128xf32>
    %c4 = arith.constant 4 : index
    %c0_24 = arith.constant 0 : index
    %51 = vector.load %arg5[%c4, %c0_24] : memref<8x128xf32, #tpu.memory_space<vmem>>, vector<1x128xf32>
    tpu.vector_store %arg5[%c4, %c0_24], %50 {strides = array<i32>} : memref<8x128xf32, #tpu.memory_space<vmem>>, vector<1x128xf32>,
    %c5_i32 = arith.constant 5 : i32
    %52 = arith.addi %0, %c5_i32 : i32
    %53 = arith.index_cast %52 : i32 to index
    %54 = memref.load %arg1[%53] : memref<16xi32, #tpu.memory_space<smem>>
    %c0_i32_25 = arith.constant 0 : i32
    %c63_i32_26 = arith.constant 63 : i32
    %55 = arith.maxsi %c0_i32_25, %54 : i32
    %56 = arith.minsi %c63_i32_26, %55 : i32
    %57 = arith.index_cast %56 : i32 to index
    %c0_27 = arith.constant 0 : index
    %58 = vector.load %arg3[%57, %c0_27] : memref<64x128xf32, #tpu.memory_space<vmem>>, vector<1x128xf32>
    %c5 = arith.constant 5 : index
    %c0_28 = arith.constant 0 : index
    %59 = vector.load %arg5[%c5, %c0_28] : memref<8x128xf32, #tpu.memory_space<vmem>>, vector<1x128xf32>
    tpu.vector_store %arg5[%c5, %c0_28], %58 {strides = array<i32>} : memref<8x128xf32, #tpu.memory_space<vmem>>, vector<1x128xf32>,
    %c6_i32 = arith.constant 6 : i32
    %60 = arith.addi %0, %c6_i32 : i32
    %61 = arith.index_cast %60 : i32 to index
    %62 = memref.load %arg1[%61] : memref<16xi32, #tpu.memory_space<smem>>
    %c0_i32_29 = arith.constant 0 : i32
    %c63_i32_30 = arith.constant 63 : i32
    %63 = arith.maxsi %c0_i32_29, %62 : i32
    %64 = arith.minsi %c63_i32_30, %63 : i32
    %65 = arith.index_cast %64 : i32 to index
    %c0_31 = arith.constant 0 : index
    %66 = vector.load %arg3[%65, %c0_31] : memref<64x128xf32, #tpu.memory_space<vmem>>, vector<1x128xf32>
    %c6 = arith.constant 6 : index
    %c0_32 = arith.constant 0 : index
    %67 = vector.load %arg5[%c6, %c0_32] : memref<8x128xf32, #tpu.memory_space<vmem>>, vector<1x128xf32>
    tpu.vector_store %arg5[%c6, %c0_32], %66 {strides = array<i32>} : memref<8x128xf32, #tpu.memory_space<vmem>>, vector<1x128xf32>,
    %c7_i32 = arith.constant 7 : i32
    %68 = arith.addi %0, %c7_i32 : i32
    %69 = arith.index_cast %68 : i32 to index
    %70 = memref.load %arg1[%69] : memref<16xi32, #tpu.memory_space<smem>>
    %c0_i32_33 = arith.constant 0 : i32
    %c63_i32_34 = arith.constant 63 : i32
    %71 = arith.maxsi %c0_i32_33, %70 : i32
    %72 = arith.minsi %c63_i32_34, %71 : i32
    %73 = arith.index_cast %72 : i32 to index
    %c0_35 = arith.constant 0 : index
    %74 = vector.load %arg3[%73, %c0_35] : memref<64x128xf32, #tpu.memory_space<vmem>>, vector<1x128xf32>
    %c7 = arith.constant 7 : index
    %c0_36 = arith.constant 0 : index
    %75 = vector.load %arg5[%c7, %c0_36] : memref<8x128xf32, #tpu.memory_space<vmem>>, vector<1x128xf32>
    tpu.vector_store %arg5[%c7, %c0_36], %74 {strides = array<i32>} : memref<8x128xf32, #tpu.memory_space<vmem>>, vector<1x128xf32>,
    %c0_37 = arith.constant 0 : index
    %c0_38 = arith.constant 0 : index
    %76 = vector.load %arg5[%c0_37, %c0_38] : memref<8x128xf32, #tpu.memory_space<vmem>>, vector<8x128xf32>
    %cst = arith.constant 11.3137083 : f32
    %77 = vector.broadcast %cst : f32 to vector<8x128xf32>
    %78 = arith.mulf %76, %77 : vector<8x128xf32>
    %79 = arith.index_cast %11 : i32 to index
    %c0_39 = arith.constant 0 : index
    %80 = vector.load %arg2[%79, %c0_39] : memref<8x128xf32, #tpu.memory_space<vmem>>, vector<8x128xf32>
    %81 = arith.addf %78, %80 : vector<8x128xf32>
    %c0_40 = arith.constant 0 : index
    %c0_41 = arith.constant 0 : index
    %82 = vector.load %arg4[%c0_40, %c0_41] : memref<8x128xf32, #tpu.memory_space<vmem>>, vector<8x128xf32>
    tpu.vector_store %arg4[%c0_40, %c0_41], %81 {strides = array<i32>} : memref<8x128xf32, #tpu.memory_space<vmem>>, vector<8x128xf32>,
    return
  }
  func.func @transform_0(%arg0: i32, %arg1: memref<16xi32, #tpu.memory_space<smem>>) -> (i32, i32) {
    %c0_i32 = arith.constant 0 : i32
    %c0_i32_0 = arith.constant 0 : i32
    %c0_i32_1 = arith.constant 0 : i32
    return %c0_i32, %c0_i32_0 : i32, i32
  }
  func.func @transform_1(%arg0: i32, %arg1: memref<16xi32, #tpu.memory_space<smem>>) -> (i32, i32) {
    %c0_i32 = arith.constant 0 : i32
    %c0_i32_0 = arith.constant 0 : i32
    %c0_i32_1 = arith.constant 0 : i32
    return %c0_i32, %c0_i32_0 : i32, i32
  }
  func.func @transform_2(%arg0: i32, %arg1: memref<16xi32, #tpu.memory_space<smem>>) -> (i32, i32) {
    %c0_i32 = arith.constant 0 : i32
    %c0_i32_0 = arith.constant 0 : i32
    return %arg0, %c0_i32 : i32, i32
  }
}

</mosaic_0001>

<llo_original>
// kernel: tpu_custom_call.1
$region0: #{tpu_custom_call.1}
  #allocation0 [shape = 'u32[]', space=smem, size = 0x4, offset = 0x4, fixed_abs, tag = 'smem constant byte address 0x4 - core index']
  #allocation1 [shape = 'u32[144,128]{1,0:T(1,128)}', space=vmem, size = 0x12000, scoped, tag = 'internal scratch']
  #allocation2 [shape = 'f32[8,128]{1,0:T(8,128)}', space=vmem, size = 0x1000, scoped, tag = 'scratch operand']
  #allocation3 [shape = 's32[1]{0}', space=sflag, size = 0x4, scoped, tag = 'scoped memory for tpu_custom_call.1']
  #allocation4 [shape = 'u8[512]{0}', space=smem, size = 0x200, scoped, tag = 'prefetched SMEM operand 0']
  %s0 = inlined_call_operand.hbm [shape: s32[16], index: 0, kind: input, shape index: {}]
  %s1 = inlined_call_operand.hbm [shape: f32[8,128], index: 1, kind: input, shape index: {}]
  %s2 = inlined_call_operand.hbm [shape: f32[64,128], index: 2, kind: input, shape index: {}]
  %s3 = inlined_call_operand.hbm [shape: f32[16,128], index: 3, kind: output, shape index: {}]
  %s4 = sld [smem:[#allocation0]]
  $region49: #{tpu_custom_call.1} parent=0
    _
  %s6 = ssub.s32 1, %s4
  %s7 = scalar_select 0, %s6, %s4
  %9 = dma.hbm_to_smem %s0, 16, [#allocation4], [#allocation3]
  %10 = dma.done [#allocation3], 16
  %11 = sfence
  $region1: #{tpu_custom_call.1} parent=0
    #allocation5 [shape = 'u8[4096]{0}', space=vmem, size = 0x1000, scoped, tag = 'input window, operand 1, single buffered']
    #allocation6 [shape = 's32[2]{0}', space=sflag, size = 0x8, scoped, tag = 'scoped memory for tpu_custom_call.1']
    #allocation7 [shape = 's32[2]{0}', space=sflag, size = 0x8, scoped, tag = 'scoped memory for tpu_custom_call.1']
    #allocation8 [shape = 'u8[32768]{0}', space=vmem, size = 0x8000, scoped, tag = 'input window, operand 2, single buffered']
    #allocation9 [shape = 's32[1]{0}', space=sflag, size = 0x4, scoped, tag = 'scoped memory for tpu_custom_call.1']
    #allocation10 [shape = 'u8[8192]{0}', space=vmem, size = 0x2000, scoped, tag = 'output window, operand 0']
    %12 = vsyncpa [#allocation6], 0
    %13 = vsyncpa [#allocation9], 0
    %14 = vsyncpa [#allocation7], 0
    %s15 = scalar_lea.sflag [#allocation7], 1
    %16 = vsyncpa %s15, 0
    loop: start=0, step=1, limit=4
    $region2: #{tpu_custom_call.1} parent=1 // loop_pre_header
      _
    $region3: #{tpu_custom_call.1} parent=1 // loop_header
      %s18 = sphi 0, %s22
      %p19 = scmp.ge.s32.totalorder %s18, 4
      %s26 = sphi 0, %s26
      %s28 = sphi 0, %s26
      %s29 = sphi 0, %s28
      %s43 = sphi 0, %s29
      %s47 = sphi 0, %s47
      %s49 = sphi 0, %s47
      %s50 = sphi 0, %s49
      %s64 = sphi 0, %s50
      %s70 = sphi 0, %s72
      %s73 = sphi 0, %s70
      %s74 = sphi 0, %s73
      %s90 = sphi 0, %s74
    $region4: #{tpu_custom_call.1} parent=1 // loop_header_branch
      %21 = sbr.rel (%p19) target = $region8
    $region5: #{tpu_custom_call.1} parent=1 // loop_body
      %s23 = ssub.s32 %s18, 1
      %s24 = ssub.s32 %s18, 2
      %s25 = sadd.s32 %s18, 1
      %s27 = sadd.s32 %s26, 1
      %p30 = scmp.eq.s32.totalorder %s18, 1
      %p31 = scmp.ne.s32.totalorder %s26, %s28
      %p32 = scmp.eq.s32.totalorder %s18, 0
      %p33 = por %p31, %p32
      %p34 = scmp.ne.s32.totalorder %s26, %s28
      %p35 = scmp.eq.s32.totalorder %s23, 1
      %p36 = por %p34, %p35
      %p37 = scmp.ne.s32.totalorder %s28, %s29
      %p38 = scmp.eq.s32.totalorder %s23, 0
      %p39 = por %p37, %p38
      %p40 = scmp.ne.s32.totalorder %s28, %s29
      %p41 = scmp.eq.s32.totalorder %s24, 1
      %p42 = por %p40, %p41
      %p44 = scmp.ne.s32.totalorder %s29, %s43
      %p45 = scmp.eq.s32.totalorder %s24, 0
      %p46 = por %p44, %p45
      %s48 = sadd.s32 %s47, 1
      %p51 = scmp.eq.s32.totalorder %s18, 1
      %p52 = scmp.ne.s32.totalorder %s47, %s49
      %p53 = scmp.eq.s32.totalorder %s18, 0
      %p54 = por %p52, %p53
      %p55 = scmp.ne.s32.totalorder %s47, %s49
      %p56 = scmp.eq.s32.totalorder %s23, 1
      %p57 = por %p55, %p56
      %p58 = scmp.ne.s32.totalorder %s49, %s50
      %p59 = scmp.eq.s32.totalorder %s23, 0
      %p60 = por %p58, %p59
      %p61 = scmp.ne.s32.totalorder %s49, %s50
      %p62 = scmp.eq.s32.totalorder %s24, 1
      %p63 = por %p61, %p62
      %p65 = scmp.ne.s32.totalorder %s50, %s64
      %p66 = scmp.eq.s32.totalorder %s24, 0
      %p67 = por %p65, %p66
      %s68 = ssub.s32 %s18, %s25
      %p69 = scmp.eq.s32.totalorder %s68, 0
      %s71 = sadd.s32 %s70, 1
      %s72 = scalar_select %p69, %s70, %s71
      %p75 = pneg %p69
      %p76 = scmp.eq.s32.totalorder %s18, 1
      %p77 = por %p75, %p76
      %p78 = scmp.ne.s32.totalorder %s70, %s73
      %p79 = scmp.eq.s32.totalorder %s18, 0
      %p80 = por %p78, %p79
      %p81 = scmp.ne.s32.totalorder %s70, %s73
      %p82 = scmp.eq.s32.totalorder %s23, 1
      %p83 = por %p81, %p82
      %p84 = scmp.ne.s32.totalorder %s73, %s74
      %p85 = scmp.eq.s32.totalorder %s23, 0
      %p86 = por %p84, %p85
      %p87 = scmp.ne.s32.totalorder %s73, %s74
      %p88 = scmp.eq.s32.totalorder %s24, 1
      %p89 = por %p87, %p88
      %p91 = scmp.ne.s32.totalorder %s74, %s90
      %p92 = scmp.eq.s32.totalorder %s24, 0
      %p93 = por %p91, %p92
      %p94 = scmp.le.s32.totalorder 1, %s18
      %p95 = scmp.lt.s32.totalorder %s18, 3
      %p96 = pnand %p94, %p95
      %p97 = pneg %p96
      // Predicated region
      $region9: #{tpu_custom_call.1} parent=5 // pred_check
        _
      $region10: #{tpu_custom_call.1} parent=5 // pred_check_branch
        %99 = sbr.rel (%p96) target = $region12
      $region11: #{tpu_custom_call.1} parent=5 // pred_region
        %s100 = ssub.s32 %s18, 1
        // Predicated region
        $region13: #{tpu_custom_call.1} parent=11 // pred_check
          %p101 = pneg %p39
        $region14: #{tpu_custom_call.1} parent=11 // pred_check_branch
          %103 = sbr.rel (%p101) target = $region16
        $region15: #{tpu_custom_call.1} parent=11 // pred_region
          %s105 = ssub.s32 128, 128
          %106 = vsyncadd [#allocation6], %s105
          %s108 = sshll.u32 [#allocation5], 4
          %s109 = int_to_ptr.vmem [resolvable:$true] %s108
          %111 = dma.hbm_to_vmem [thread:$0]  %s1, 128, %s109, [#allocation6]
        $region16: #{tpu_custom_call.1} parent=11 // pred_fallthru
          _
        // Predicated region
        $region17: #{tpu_custom_call.1} parent=11 // pred_check
          %p112 = pneg %p60
        $region18: #{tpu_custom_call.1} parent=11 // pred_check_branch
          %114 = sbr.rel (%p112) target = $region20
        $region19: #{tpu_custom_call.1} parent=11 // pred_region
          %s116 = ssub.s32 1024, 1024
          %117 = vsyncadd [#allocation9], %s116
          %s118 = sshll.u32 [#allocation8], 4
          %s119 = int_to_ptr.vmem [resolvable:$true] %s118
          %124 = dma.hbm_to_vmem [thread:$0]  %s2, 1024, %s119, [#allocation9], 128, 128, 8
        $region20: #{tpu_custom_call.1} parent=11 // pred_fallthru
          _
      $region12: #{tpu_custom_call.1} parent=5 // pred_fallthru
        _
      %p125 = scmp.lt.s32.totalorder %s18, 2
      // Predicated region
      $region21: #{tpu_custom_call.1} parent=5 // pred_check
        %p126 = pneg %p125
      $region22: #{tpu_custom_call.1} parent=5 // pred_check_branch
        %128 = sbr.rel (%p126) target = $region24
      $region23: #{tpu_custom_call.1} parent=5 // pred_region
        _
      $region24: #{tpu_custom_call.1} parent=5 // pred_fallthru
        _
      %p129 = scmp.le.s32.totalorder 1, %s18
      %p130 = scmp.lt.s32.totalorder %s18, 3
      %p131 = pnand %p129, %p130
      %p132 = pneg %p131
      // Predicated region
      $region25: #{tpu_custom_call.1} parent=5 // pred_check
        _
      $region26: #{tpu_custom_call.1} parent=5 // pred_check_branch
        %134 = sbr.rel (%p131) target = $region28
      $region27: #{tpu_custom_call.1} parent=5 // pred_region
        %s135 = ssub.s32 %s18, 1
        // Predicated region
        $region29: #{tpu_custom_call.1} parent=27 // pred_check
          %p136 = pneg %p39
        $region30: #{tpu_custom_call.1} parent=27 // pred_check_branch
          %138 = sbr.rel (%p136) target = $region32
        $region31: #{tpu_custom_call.1} parent=27 // pred_region
          %139 = dma.done [#allocation6], 128
        $region32: #{tpu_custom_call.1} parent=27 // pred_fallthru
          _
        // Predicated region
        $region33: #{tpu_custom_call.1} parent=27 // pred_check
          %p140 = pneg %p60
        $region34: #{tpu_custom_call.1} parent=27 // pred_check_branch
          %142 = sbr.rel (%p140) target = $region36
        $region35: #{tpu_custom_call.1} parent=27 // pred_region
          %143 = dma.done [#allocation9], 1024
        $region36: #{tpu_custom_call.1} parent=27 // pred_fallthru
          _
        %p144 = pneg %p39
        %p145 = pneg %p36
        %p146 = pneg %p60
        %p147 = pneg %p57
        %p148 = pneg %p86
        %p149 = pneg %p83
        %s150 = sand.u32 %s73, 1
        %s151 = scalar_lea.sflag [#allocation7], %s150
        %s152 = sand.u32 %s73, 1
        %s153 = smul.addr %s152, 8
        %s154 = scalar_lea.vmem [#allocation10], %s153
        %s155 = smul.u32 %s23, 8
        %p156 = scmp.lt.s32.totalorder %s155, 0
        %s157 = ssub.s32 0, %s155
        %s158 = scalar_select %p156, %s157, %s155
        %s159 = sand.u32 %s158, 7
        %s160 = ssub.s32 0, %s159
        %s161 = scalar_select %p156, %s160, %s159
        %p162 = scmp.ne.s32.totalorder %s161, 0
        %p163 = scmp.lt.s32.totalorder %s161, 0
        %p164 = pnand %p163, %p162
        %p165 = pneg %p164
        %s166 = sadd.s32 %s161, 8
        %s167 = scalar_select %p165, %s166, %s161
        %s168 = sld [smem:[#allocation4 + %s155]]
        %p169 = scmp.gt.s32.totalorder %s168, 0
        %s170 = scalar_select %p169, %s168, 0
        %p171 = scmp.lt.s32.totalorder %s170, 63
        %s172 = scalar_select %p171, %s170, 63
        %s173 = scalar_lea.vmem [#allocation8], %s172
        %v174 = vld [vmem:[%s173] sm:$0x1]
        %175 = vst [vmem:[#allocation2] sm:$0x1] %v174
        %s176 = sadd.s32 %s155, 1
        %s177 = sld [smem:[#allocation4 + %s176]]
        %p178 = scmp.gt.s32.totalorder %s177, 0
        %s179 = scalar_select %p178, %s177, 0
        %p180 = scmp.lt.s32.totalorder %s179, 63
        %s181 = scalar_select %p180, %s179, 63
        %s182 = scalar_lea.vmem [#allocation8], %s181
        %v183 = vld [vmem:[%s182] sm:$0x1]
        %184 = vst [vmem:[#allocation2 + $0x1] sm:$0x1] %v183
        %s185 = sadd.s32 %s155, 2
        %s186 = sld [smem:[#allocation4 + %s185]]
        %p187 = scmp.gt.s32.totalorder %s186, 0
        %s188 = scalar_select %p187, %s186, 0
        %p189 = scmp.lt.s32.totalorder %s188, 63
        %s190 = scalar_select %p189, %s188, 63
        %s191 = scalar_lea.vmem [#allocation8], %s190
        %v192 = vld [vmem:[%s191] sm:$0x1]
        %193 = vst [vmem:[#allocation2 + $0x2] sm:$0x1] %v192
        %s194 = sadd.s32 %s155, 3
        %s195 = sld [smem:[#allocation4 + %s194]]
        %p196 = scmp.gt.s32.totalorder %s195, 0
        %s197 = scalar_select %p196, %s195, 0
        %p198 = scmp.lt.s32.totalorder %s197, 63
        %s199 = scalar_select %p198, %s197, 63
        %s200 = scalar_lea.vmem [#allocation8], %s199
        %v201 = vld [vmem:[%s200] sm:$0x1]
        %202 = vst [vmem:[#allocation2 + $0x3] sm:$0x1] %v201
        %s203 = sadd.s32 %s155, 4
        %s204 = sld [smem:[#allocation4 + %s203]]
        %p205 = scmp.gt.s32.totalorder %s204, 0
        %s206 = scalar_select %p205, %s204, 0
        %p207 = scmp.lt.s32.totalorder %s206, 63
        %s208 = scalar_select %p207, %s206, 63
        %s209 = scalar_lea.vmem [#allocation8], %s208
        %v210 = vld [vmem:[%s209] sm:$0x1]
        %211 = vst [vmem:[#allocation2 + $0x4] sm:$0x1] %v210
        %s212 = sadd.s32 %s155, 5
        %s213 = sld [smem:[#allocation4 + %s212]]
        %p214 = scmp.gt.s32.totalorder %s213, 0
        %s215 = scalar_select %p214, %s213, 0
        %p216 = scmp.lt.s32.totalorder %s215, 63
        %s217 = scalar_select %p216, %s215, 63
        %s218 = scalar_lea.vmem [#allocation8], %s217
        %v219 = vld [vmem:[%s218] sm:$0x1]
        %220 = vst [vmem:[#allocation2 + $0x5] sm:$0x1] %v219
        %s221 = sadd.s32 %s155, 6
        %s222 = sld [smem:[#allocation4 + %s221]]
        %p223 = scmp.gt.s32.totalorder %s222, 0
        %s224 = scalar_select %p223, %s222, 0
        %p225 = scmp.lt.s32.totalorder %s224, 63
        %s226 = scalar_select %p225, %s224, 63
        %s227 = scalar_lea.vmem [#allocation8], %s226
        %v228 = vld [vmem:[%s227] sm:$0x1]
        %229 = vst [vmem:[#allocation2 + $0x6] sm:$0x1] %v228
        %s230 = sadd.s32 %s155, 7
        %s231 = sld [smem:[#allocation4 + %s230]]
        %p232 = scmp.gt.s32.totalorder %s231, 0
        %s233 = scalar_select %p232, %s231, 0
        %p234 = scmp.lt.s32.totalorder %s233, 63
        %s235 = scalar_select %p234, %s233, 63
        %s236 = scalar_lea.vmem [#allocation8], %s235
        %v237 = vld [vmem:[%s236] sm:$0x1]
        %238 = vst [vmem:[#allocation2 + $0x7] sm:$0x1] %v237
        %v239 = vld [vmem:[#allocation2] sm:$0xff]
        %v240 = vmul.f32 %v239, 11.313708
        %s241 = scalar_lea.vmem [#allocation5], %s167
        %v242 = vld [vmem:[%s241] sm:$0xff]
        %v243 = vadd.f32 %v240, %v242
        %244 = vst [vmem:[%s154] sm:$0xff] %v243
        %s245 = sand.u32 %s73, 1
        %s246 = scalar_lea.sflag [#allocation7], %s245
        %s247 = sand.u32 %s73, 1
        %s248 = smul.addr %s247, 8
        %s249 = scalar_lea.vmem [#allocation10], %s248
        // Predicated region
        $region37: #{tpu_custom_call.1} parent=27 // pred_check
          %p250 = pneg %p83
        $region38: #{tpu_custom_call.1} parent=27 // pred_check_branch
          %252 = sbr.rel (%p250) target = $region40
        $region39: #{tpu_custom_call.1} parent=27 // pred_region
          %s254 = ssub.s32 128, 128
          %255 = vsyncadd %s246, %s254
          %s256 = smul.addr %s23, 128
          %s257 = scalar_lea.hbm %s3, %s256
          %s259 = sshll.u32 %s249, 4
          %s260 = int_to_ptr.vmem [resolvable:$true] %s259
          %262 = dma.vmem_to_hbm [thread:$0]  %s260, 128, %s257, %s246
        $region40: #{tpu_custom_call.1} parent=27 // pred_fallthru
          _
      $region28: #{tpu_custom_call.1} parent=5 // pred_fallthru
        _
      %p263 = scmp.le.s32.totalorder 2, %s18
      // Predicated region
      $region41: #{tpu_custom_call.1} parent=5 // pred_check
        %p264 = pneg %p263
      $region42: #{tpu_custom_call.1} parent=5 // pred_check_branch
        %266 = sbr.rel (%p264) target = $region44
      $region43: #{tpu_custom_call.1} parent=5 // pred_region
        %s267 = ssub.s32 %s18, 2
        // Predicated region
        $region45: #{tpu_custom_call.1} parent=43 // pred_check
          %p268 = pneg %p89
        $region46: #{tpu_custom_call.1} parent=43 // pred_check_branch
          %270 = sbr.rel (%p268) target = $region48
        $region47: #{tpu_custom_call.1} parent=43 // pred_region
          %s271 = sand.u32 %s74, 1
          %s272 = scalar_lea.sflag [#allocation7], %s271
          %s273 = sand.u32 %s74, 1
          %s274 = smul.addr %s273, 8
          %s275 = scalar_lea.vmem [#allocation10], %s274
          %276 = dma.done %s272, 128
        $region48: #{tpu_custom_call.1} parent=43 // pred_fallthru
          _
      $region44: #{tpu_custom_call.1} parent=5 // pred_fallthru
        _
    $region6: #{tpu_custom_call.1} parent=1 // loop_footer
      %s22 = sadd.s32 1, %s18
    $region7: #{tpu_custom_call.1} parent=1 // loop_footer_branch
      %17 = sbr.rel target = $region3
    $region8: #{tpu_custom_call.1} parent=1 // loop_exit
      _
    %277 = vsyncpa [#allocation6], 1
    %s278 = scalar_lea.sflag [#allocation6], 1
    %279 = vsyncpa %s278, 1
    %280 = vsyncpa [#allocation9], 1
    %281 = vsyncpa [#allocation7], 1
    %s282 = scalar_lea.sflag [#allocation7], 1
    %283 = vsyncpa %s282, 1

</llo_original>
